<compile_context>
chip_gen: v6e
topology: v6e:2x2x1
jax: 0.10.0
libtpu: 0.0.40
codegen_flags: <defaults>
</compile_context>

<pallas_src>
import functools

import jax
import jax.numpy as jnp
from jax.experimental import pallas as pl
from jax.experimental.pallas import tpu as pltpu

_LANE = 128
_SUBLANE = 8
_ROW_TILE = 2048                       # rows of 128 lanes / grid step = 1 MiB f32
_FUSED_VMEM_BUDGET = 2 * 1024 * 1024   # f32 bytes: whole-problem-in-VMEM threshold


def _nelems(x):
    n = 1
    for s in x.shape:
        n *= int(s)
    return n


def _f32_bytes(x):
    return _nelems(x) * 4


# ---------------------------------------------------------------------------
# Fused whole-array path (small inputs): one kernel, N MSEs, (N,) SMEM output.
# ---------------------------------------------------------------------------
def _fused_mse_kernel(*refs, inv_ns):
    o_ref = refs[-1]
    for k, inv_n in enumerate(inv_ns):
        a = refs[2 * k][...].astype(jnp.float32)
        b = refs[2 * k + 1][...].astype(jnp.float32)
        d = a - b
        o_ref[k] = jnp.sum(d * d) * jnp.float32(inv_n)


def _fused_mse(pairs):
    """pairs: list of (pred, target). Returns a (len(pairs),) f32 array of MSEs."""
    flat_inputs = []
    in_specs = []
    inv_ns = []
    for p, g in pairs:
        assert p.shape == g.shape, (p.shape, g.shape)
        inv_ns.append(1.0 / float(_nelems(p)))
        for x in (p, g):
            flat_inputs.append(x)
            zeros = (0,) * x.ndim
            # Full-array block: no tiling padding, no wrapper reshape/cast/pad.
            in_specs.append(pl.BlockSpec(x.shape, lambda i, _z=zeros: _z))

    kernel = functools.partial(_fused_mse_kernel, inv_ns=tuple(inv_ns))
    out = pl.pallas_call(
        kernel,
        out_shape=jax.ShapeDtypeStruct((len(pairs),), jnp.float32),
        grid_spec=pltpu.PrefetchScalarGridSpec(
            num_scalar_prefetch=0,
            grid=(1,),
            in_specs=in_specs,
            out_specs=pl.BlockSpec(memory_space=pltpu.SMEM),
        ),
        compiler_params=pltpu.CompilerParams(
            dimension_semantics=("arbitrary",),
        ),
    )(*flat_inputs)
    return out


# ---------------------------------------------------------------------------
# Tiled fallback (large inputs): lane-dense grid reduction.
# ---------------------------------------------------------------------------
def _mse_tiled_kernel(p_ref, g_ref, o_ref, *, rows, tile, tiles_per_core):
    c = pl.program_id(0)   # TensorCore partition ("parallel")
    t = pl.program_id(1)   # reduction step   ("arbitrary")

    @pl.when(t == 0)
    def _():
        o_ref[...] = jnp.zeros_like(o_ref)

    d = p_ref[...].astype(jnp.float32) - g_ref[...].astype(jnp.float32)
    d2 = d * d

    # Mask ragged / duplicated tail rows.  Uses the UNclamped block index so a
    # clamped duplicate block (last core, uneven split) contributes exactly 0.
    base_row = (c * tiles_per_core + t) * tile
    row_id = base_row + jax.lax.broadcasted_iota(jnp.int32, (tile, _LANE), 0)
    d2 = jnp.where(row_id < rows, d2, 0.0)

    # Fold the tile to one (8,128) vreg with pure VPU adds, then accumulate in
    # the (VMEM-resident) output block -> negligible accumulator RMW traffic.
    o_ref[0] += jnp.sum(d2.reshape(tile // _SUBLANE, _SUBLANE, _LANE), axis=0)


def _mse_tiled(pred, target):
    assert pred.shape == target.shape, (pred.shape, target.shape)
    n = _nelems(pred)
    inv_n = 1.0 / float(n)

    p = pred.reshape(-1)
    g = target.reshape(-1)
    # Pad only to a 128-lane multiple (both operands identically -> diff == 0),
    # keeping the HBM-resident data in its original dtype.
    rem = n % _LANE
    if rem:
        pad = _LANE - rem
        p = jnp.pad(p, (0, pad))
        g = jnp.pad(g, (0, pad))
    rows = -(-n // _LANE)
    p2 = p.reshape(rows, _LANE)
    g2 = g.reshape(rows, _LANE)

    tile = _ROW_TILE
    nblocks = -(-rows // tile)
    ncores = 2 if nblocks >= 2 else 1          # megacore split; serial on 1-TC chips
    tiles_per_core = -(-nblocks // ncores)

    def in_map(c, t):
        # Clamp so the possible extra step on the last core re-reads a valid
        # block; its contribution is masked to zero in-kernel.
        return (jnp.minimum(c * tiles_per_core + t, nblocks - 1), 0)

    kernel = functools.partial(
        _mse_tiled_kernel, rows=rows, tile=tile, tiles_per_core=tiles_per_core
    )
    partials = pl.pallas_call(
        kernel,
        out_shape=jax.ShapeDtypeStruct((ncores, _SUBLANE, _LANE), jnp.float32),
        grid_spec=pltpu.PrefetchScalarGridSpec(
            num_scalar_prefetch=0,
            grid=(ncores, tiles_per_core),
            in_specs=[
                pl.BlockSpec((tile, _LANE), in_map),
                pl.BlockSpec((tile, _LANE), in_map),
            ],
            out_specs=pl.BlockSpec((1, _SUBLANE, _LANE), lambda c, t: (c, 0, 0)),
        ),
        compiler_params=pltpu.CompilerParams(
            dimension_semantics=("parallel", "arbitrary"),
        ),
    )(p2, g2)
    # Tiny final reduce of the per-core (8,128) partials + precomputed 1/N.
    return jnp.sum(partials) * jnp.float32(inv_n)


# ---------------------------------------------------------------------------
# Module forward
# ---------------------------------------------------------------------------
def reconstruction_loss(pre_frame, train_y, foot_pre, foot_tar, pos_pre, pos_gt):
    """Forward pass of ReconstructionLoss: returns (rec_loss, foot_loss, pos_loss)."""
    pairs = [
        (pre_frame, train_y),   # rec_loss  (pre_frame[:, :, :] == pre_frame)
        (foot_pre, foot_tar),   # foot_loss
        (pos_pre, pos_gt),      # pos_loss
    ]
    total_f32 = sum(_f32_bytes(a) + _f32_bytes(b) for a, b in pairs)
    if total_f32 <= _FUSED_VMEM_BUDGET:
        out = _fused_mse(pairs)
        return out[0], out[1], out[2]

    losses = []
    for a, b in pairs:
        if _f32_bytes(a) + _f32_bytes(b) <= _FUSED_VMEM_BUDGET:
            losses.append(_fused_mse([(a, b)])[0])
        else:
            losses.append(_mse_tiled(a, b))
    return tuple(losses)


def reconstruction_loss_ref(pre_frame, train_y, foot_pre, foot_tar, pos_pre, pos_gt):
    def mse(a, b):
        d = a.astype(jnp.float32) - b.astype(jnp.float32)
        return jnp.mean(d * d)

    return mse(pre_frame, train_y), mse(foot_pre, foot_tar), mse(pos_pre, pos_gt)


if __name__ == "__main__":
    # Small shapes consistent with a motion-reconstruction setup:
    #   pre_frame / train_y : [B, S, J*3]   (full-pose frames)
    #   pos_pre  / pos_gt   : [B, S, J, 3]  (joint positions)
    #   foot_pre / foot_tar : [B, S, 4]     (foot contacts)
    B, S, J = 2, 8, 24

    key = jax.random.PRNGKey(0)
    k1, k2, k3, k4, k5, k6, k7, k8 = jax.random.split(key, 8)
    pre_frame = jax.random.normal(k1, (B, S, J * 3), dtype=jnp.float32)
    train_y = jax.random.normal(k2, (B, S, J * 3), dtype=jnp.float32)
    pos_pre = jax.random.normal(k3, (B, S, J, 3), dtype=jnp.float32)
    pos_gt = jax.random.normal(k4, (B, S, J, 3), dtype=jnp.float32)
    foot_pre = jax.random.normal(k5, (B, S, 4), dtype=jnp.float32)
    foot_tar = jax.random.normal(k6, (B, S, 4), dtype=jnp.float32)

    rec_loss, foot_loss, pos_loss = reconstruction_loss(
        pre_frame, train_y, foot_pre, foot_tar, pos_pre, pos_gt
    )
    jax.block_until_ready((rec_loss, foot_loss, pos_loss))

    rec_ref, foot_ref, pos_ref = reconstruction_loss_ref(
        pre_frame, train_y, foot_pre, foot_tar, pos_pre, pos_gt
    )
    assert jnp.allclose(rec_loss, rec_ref, rtol=1e-5, atol=1e-5), (rec_loss, rec_ref)
    assert jnp.allclose(foot_loss, foot_ref, rtol=1e-5, atol=1e-5), (foot_loss, foot_ref)
    assert jnp.allclose(pos_loss, pos_ref, rtol=1e-5, atol=1e-5), (pos_loss, pos_ref)

    # Also exercise the large-input tiled fallback (ragged tail rows + uneven
    # per-core tile split) against the jnp reference.
    big_p = jax.random.normal(k7, (40, 110, 128), dtype=jnp.float32)  # 563200 elems
    big_g = jax.random.normal(k8, (40, 110, 128), dtype=jnp.float32)
    big_loss = _mse_tiled(big_p, big_g)
    jax.block_until_ready(big_loss)
    big_ref = jnp.mean((big_p - big_g) ** 2)
    assert jnp.allclose(big_loss, big_ref, rtol=1e-4, atol=1e-5), (big_loss, big_ref)

    print("KERNEL_OK")
</pallas_src>

<mosaic_0001>
module attributes {stable_mosaic.version = 11 : i64} {
  func.func @_fused_mse_kernel(%arg0: i32, %arg1: memref<2x8x72xf32, #tpu.memory_space<vmem>>, %arg2: memref<2x8x72xf32, #tpu.memory_space<vmem>>, %arg3: memref<2x8x4xf32, #tpu.memory_space<vmem>>, %arg4: memref<2x8x4xf32, #tpu.memory_space<vmem>>, %arg5: memref<2x8x24x3xf32, #tpu.memory_space<vmem>>, %arg6: memref<2x8x24x3xf32, #tpu.memory_space<vmem>>, %arg7: memref<3xf32, #tpu.memory_space<smem>>) attributes {dimension_semantics = [#tpu.dimension_semantics<arbitrary>], iteration_bounds = array<i64: 1>, scalar_prefetch = 0 : i64, scratch_operands = 0 : i64, tpu.core_type = #tpu.core_type<tc>, window_params = [{pipeline_mode = #tpu.pipeline_mode<synchronous>, transform_indices = @transform_0, window_bounds = array<i64: 2, 8, 72>}, {pipeline_mode = #tpu.pipeline_mode<synchronous>, transform_indices = @transform_1, window_bounds = array<i64: 2, 8, 72>}, {pipeline_mode = #tpu.pipeline_mode<synchronous>, transform_indices = @transform_2, window_bounds = array<i64: 2, 8, 4>}, {pipeline_mode = #tpu.pipeline_mode<synchronous>, transform_indices = @transform_3, window_bounds = array<i64: 2, 8, 4>}, {pipeline_mode = #tpu.pipeline_mode<synchronous>, transform_indices = @transform_4, window_bounds = array<i64: 2, 8, 24, 3>}, {pipeline_mode = #tpu.pipeline_mode<synchronous>, transform_indices = @transform_5, window_bounds = array<i64: 2, 8, 24, 3>}, {transform_indices = @transform_6, window_bounds = array<i64: 3>}]} {
    %c0 = arith.constant 0 : index
    %c0_0 = arith.constant 0 : index
    %c0_1 = arith.constant 0 : index
    %0 = vector.load %arg1[%c0, %c0_0, %c0_1] : memref<2x8x72xf32, #tpu.memory_space<vmem>>, vector<2x8x72xf32>
    %c0_2 = arith.constant 0 : index
    %c0_3 = arith.constant 0 : index
    %c0_4 = arith.constant 0 : index
    %1 = vector.load %arg2[%c0_2, %c0_3, %c0_4] : memref<2x8x72xf32, #tpu.memory_space<vmem>>, vector<2x8x72xf32>
    %2 = arith.subf %0, %1 : vector<2x8x72xf32>
    %3 = arith.mulf %2, %2 : vector<2x8x72xf32>
    %4 = vector.shape_cast %3 : vector<2x8x72xf32> to vector<1x2x8x72xf32>
    %cst = arith.constant dense<0.000000e+00> : vector<1xf32>
    %5 = vector.multi_reduction <add>, %4, %cst [1, 2, 3] : vector<1x2x8x72xf32> to vector<1xf32>
    %6 = vector.shape_cast %5 : vector<1xf32> to vector<1x1x1x1xf32>
    %7 = vector.extract %6[0, 0, 0, 0] : f32 from vector<1x1x1x1xf32>
    %cst_5 = arith.constant 8.68055562E-4 : f32
    %8 = arith.mulf %7, %cst_5 : f32
    %c0_6 = arith.constant 0 : index
    %9 = memref.load %arg7[%c0_6] : memref<3xf32, #tpu.memory_space<smem>>
    memref.store %8, %arg7[%c0_6] : memref<3xf32, #tpu.memory_space<smem>>
    %c0_7 = arith.constant 0 : index
    %c0_8 = arith.constant 0 : index
    %c0_9 = arith.constant 0 : index
    %10 = vector.load %arg3[%c0_7, %c0_8, %c0_9] : memref<2x8x4xf32, #tpu.memory_space<vmem>>, vector<2x8x4xf32>
    %c0_10 = arith.constant 0 : index
    %c0_11 = arith.constant 0 : index
    %c0_12 = arith.constant 0 : index
    %11 = vector.load %arg4[%c0_10, %c0_11, %c0_12] : memref<2x8x4xf32, #tpu.memory_space<vmem>>, vector<2x8x4xf32>
    %12 = arith.subf %10, %11 : vector<2x8x4xf32>
    %13 = arith.mulf %12, %12 : vector<2x8x4xf32>
    %14 = vector.shape_cast %13 : vector<2x8x4xf32> to vector<1x2x8x4xf32>
    %cst_13 = arith.constant dense<0.000000e+00> : vector<1xf32>
    %15 = vector.multi_reduction <add>, %14, %cst_13 [1, 2, 3] : vector<1x2x8x4xf32> to vector<1xf32>
    %16 = vector.shape_cast %15 : vector<1xf32> to vector<1x1x1x1xf32>
    %17 = vector.extract %16[0, 0, 0, 0] : f32 from vector<1x1x1x1xf32>
    %cst_14 = arith.constant 1.562500e-02 : f32
    %18 = arith.mulf %17, %cst_14 : f32
    %c1 = arith.constant 1 : index
    %19 = memref.load %arg7[%c1] : memref<3xf32, #tpu.memory_space<smem>>
    memref.store %18, %arg7[%c1] : memref<3xf32, #tpu.memory_space<smem>>
    %c0_15 = arith.constant 0 : index
    %c0_16 = arith.constant 0 : index
    %c0_17 = arith.constant 0 : index
    %c0_18 = arith.constant 0 : index
    %20 = vector.load %arg5[%c0_15, %c0_16, %c0_17, %c0_18] : memref<2x8x24x3xf32, #tpu.memory_space<vmem>>, vector<2x8x24x3xf32>
    %c0_19 = arith.constant 0 : index
    %c0_20 = arith.constant 0 : index
    %c0_21 = arith.constant 0 : index
    %c0_22 = arith.constant 0 : index
    %21 = vector.load %arg6[%c0_19, %c0_20, %c0_21, %c0_22] : memref<2x8x24x3xf32, #tpu.memory_space<vmem>>, vector<2x8x24x3xf32>
    %22 = arith.subf %20, %21 : vector<2x8x24x3xf32>
    %23 = arith.mulf %22, %22 : vector<2x8x24x3xf32>
    %24 = vector.shape_cast %23 : vector<2x8x24x3xf32> to vector<1x2x8x24x3xf32>
    %cst_23 = arith.constant dense<0.000000e+00> : vector<1xf32>
    %25 = vector.multi_reduction <add>, %24, %cst_23 [1, 2, 3, 4] : vector<1x2x8x24x3xf32> to vector<1xf32>
    %26 = vector.shape_cast %25 : vector<1xf32> to vector<1x1x1x1x1xf32>
    %27 = vector.extract %26[0, 0, 0, 0, 0] : f32 from vector<1x1x1x1x1xf32>
    %cst_24 = arith.constant 8.68055562E-4 : f32
    %28 = arith.mulf %27, %cst_24 : f32
    %c2 = arith.constant 2 : index
    %29 = memref.load %arg7[%c2] : memref<3xf32, #tpu.memory_space<smem>>
    memref.store %28, %arg7[%c2] : memref<3xf32, #tpu.memory_space<smem>>
    return
  }
  func.func @transform_0(%arg0: i32) -> (i32, i32, i32) {
    %c0_i32 = arith.constant 0 : i32
    %c0_i32_0 = arith.constant 0 : i32
    %c0_i32_1 = arith.constant 0 : i32
    %c0_i32_2 = arith.constant 0 : i32
    return %c0_i32, %c0_i32_0, %c0_i32_1 : i32, i32, i32
  }
  func.func @transform_1(%arg0: i32) -> (i32, i32, i32) {
    %c0_i32 = arith.constant 0 : i32
    %c0_i32_0 = arith.constant 0 : i32
    %c0_i32_1 = arith.constant 0 : i32
    %c0_i32_2 = arith.constant 0 : i32
    return %c0_i32, %c0_i32_0, %c0_i32_1 : i32, i32, i32
  }
  func.func @transform_2(%arg0: i32) -> (i32, i32, i32) {
    %c0_i32 = arith.constant 0 : i32
    %c0_i32_0 = arith.constant 0 : i32
    %c0_i32_1 = arith.constant 0 : i32
    %c0_i32_2 = arith.constant 0 : i32
    return %c0_i32, %c0_i32_0, %c0_i32_1 : i32, i32, i32
  }
  func.func @transform_3(%arg0: i32) -> (i32, i32, i32) {
    %c0_i32 = arith.constant 0 : i32
    %c0_i32_0 = arith.constant 0 : i32
    %c0_i32_1 = arith.constant 0 : i32
    %c0_i32_2 = arith.constant 0 : i32
    return %c0_i32, %c0_i32_0, %c0_i32_1 : i32, i32, i32
  }
  func.func @transform_4(%arg0: i32) -> (i32, i32, i32, i32) {
    %c0_i32 = arith.constant 0 : i32
    %c0_i32_0 = arith.constant 0 : i32
    %c0_i32_1 = arith.constant 0 : i32
    %c0_i32_2 = arith.constant 0 : i32
    %c0_i32_3 = arith.constant 0 : i32
    return %c0_i32, %c0_i32_0, %c0_i32_1, %c0_i32_2 : i32, i32, i32, i32
  }
  func.func @transform_5(%arg0: i32) -> (i32, i32, i32, i32) {
    %c0_i32 = arith.constant 0 : i32
    %c0_i32_0 = arith.constant 0 : i32
    %c0_i32_1 = arith.constant 0 : i32
    %c0_i32_2 = arith.constant 0 : i32
    %c0_i32_3 = arith.constant 0 : i32
    return %c0_i32, %c0_i32_0, %c0_i32_1, %c0_i32_2 : i32, i32, i32, i32
  }
  func.func @transform_6(%arg0: i32) -> i32 {
    %c0_i32 = arith.constant 0 : i32
    %c0_i32_0 = arith.constant 0 : i32
    return %c0_i32 : i32
  }
}

</mosaic_0001>

<llo_original>
// kernel: tpu_custom_call.1
$region0: #{tpu_custom_call.1}
  #allocation0 [shape = 'u32[]', space=smem, size = 0x4, offset = 0x4, fixed_abs, tag = 'smem constant byte address 0x4 - core index']
  #allocation1 [shape = 'u32[144,128]{1,0:T(1,128)}', space=vmem, size = 0x12000, scoped, tag = 'internal scratch']
  %s0 = inlined_call_operand.vmem [shape: f32[2,8,72], index: 0, kind: input, shape index: {}]
  %s1 = inlined_call_operand.vmem [shape: f32[2,8,72], index: 1, kind: input, shape index: {}]
  %s2 = inlined_call_operand.vmem [shape: f32[2,8,4], index: 2, kind: input, shape index: {}]
  %s3 = inlined_call_operand.vmem [shape: f32[2,8,4], index: 3, kind: input, shape index: {}]
  %s4 = inlined_call_operand.vmem [shape: f32[2,8,24,3], index: 4, kind: input, shape index: {}]
  %s5 = inlined_call_operand.vmem [shape: f32[2,8,24,3], index: 5, kind: input, shape index: {}]
  %s6 = inlined_call_operand.hbm [shape: f32[3], index: 6, kind: output, shape index: {}]
  %s7 = sld [smem:[#allocation0]]
  $region34: #{tpu_custom_call.1} parent=0
    _
  %s9 = ssub.s32 1, %s7
  %s10 = scalar_select 0, %s9, %s7
  $region1: #{tpu_custom_call.1} parent=0
    #allocation2 [shape = 'u8[512]{0}', space=smem, size = 0x200, scoped, tag = 'output window, operand 0, single buffered']
    #allocation3 [shape = 's32[1]{0}', space=sflag, size = 0x4, scoped, tag = 'scoped memory for tpu_custom_call.1']
    %11 = vsyncpa [#allocation3], 0
    // Predicated region
    $region2: #{tpu_custom_call.1} parent=1 // pred_check
      _
    $region3: #{tpu_custom_call.1} parent=1 // pred_check_branch
      %13 = sbr.rel (0) target = $region5
    $region4: #{tpu_custom_call.1} parent=1 // pred_region
      _
    $region5: #{tpu_custom_call.1} parent=1 // pred_fallthru
      _
    // Predicated region
    $region6: #{tpu_custom_call.1} parent=1 // pred_check
      _
    $region7: #{tpu_custom_call.1} parent=1 // pred_check_branch
      %15 = sbr.rel (0) target = $region9
    $region8: #{tpu_custom_call.1} parent=1 // pred_region
      _
    $region9: #{tpu_custom_call.1} parent=1 // pred_fallthru
      _
    // Predicated region
    $region10: #{tpu_custom_call.1} parent=1 // pred_check
      _
    $region11: #{tpu_custom_call.1} parent=1 // pred_check_branch
      %17 = sbr.rel (0) target = $region13
    $region12: #{tpu_custom_call.1} parent=1 // pred_region
      _
    $region13: #{tpu_custom_call.1} parent=1 // pred_fallthru
      _
    // Predicated region
    $region14: #{tpu_custom_call.1} parent=1 // pred_check
      _
    $region15: #{tpu_custom_call.1} parent=1 // pred_check_branch
      %19 = sbr.rel (0) target = $region17
    $region16: #{tpu_custom_call.1} parent=1 // pred_region
      _
    $region17: #{tpu_custom_call.1} parent=1 // pred_fallthru
      _
    // Predicated region
    $region18: #{tpu_custom_call.1} parent=1 // pred_check
      _
    $region19: #{tpu_custom_call.1} parent=1 // pred_check_branch
      %21 = sbr.rel (0) target = $region21
    $region20: #{tpu_custom_call.1} parent=1 // pred_region
      _
    $region21: #{tpu_custom_call.1} parent=1 // pred_fallthru
      _
    // Predicated region
    $region22: #{tpu_custom_call.1} parent=1 // pred_check
      _
    $region23: #{tpu_custom_call.1} parent=1 // pred_check_branch
      %23 = sbr.rel (0) target = $region25
    $region24: #{tpu_custom_call.1} parent=1 // pred_region
      _
    $region25: #{tpu_custom_call.1} parent=1 // pred_fallthru
      _
    %v24 = vld [vmem:[%s0] sm:$0xff]
    %v25 = vld [vmem:[%s0 + $0x8] sm:$0xff]
    %v26 = vld [vmem:[%s1] sm:$0xff]
    %v27 = vld [vmem:[%s1 + $0x8] sm:$0xff]
    %v28 = vsub.f32 %v24, %v26
    %v29 = vsub.f32 %v25, %v27
    %v30 = vmul.f32 %v28, %v28
    %v31 = vmul.f32 %v29, %v29
    %vm32 = vcmask 588800
    %v33 = vsel %vm32, %v30, 0.0
    %v34 = vsel %vm32, %v31, 0.0
    %v35 = vadd.f32 %v33, %v34
    %36 = vadd.xlane.f32.xlu0 %v35
    %v37 = vpop.xlane.xlu0 %36
    %v38 = vrot.slane %v37, 4
    %v39 = vadd.f32 %v37, %v38
    %v40 = vrot.slane %v39, 2
    %v41 = vadd.f32 %v39, %v40
    %v42 = vrot.slane %v41, 1
    %v43 = vadd.f32 %v41, %v42
    %s44 = vtos %v43
    %s45 = smul.f32 %s44, 0.00086805556
    %s46 = scalar_lea.smem [#allocation2], 0
    %47 = sst [smem:[%s46]] %s45
    %v48 = vld [vmem:[%s2] sm:$0xff]
    %v49 = vld [vmem:[%s2 + $0x8] sm:$0xff]
    %v50 = vld [vmem:[%s3] sm:$0xff]
    %v51 = vld [vmem:[%s3 + $0x8] sm:$0xff]
    %v52 = vsub.f32 %v48, %v50
    %v53 = vsub.f32 %v49, %v51
    %v54 = vmul.f32 %v52, %v52
    %v55 = vmul.f32 %v53, %v53
    %vm56 = vcmask 31744
    %v57 = vsel %vm56, %v54, 0.0
    %v58 = vsel %vm56, %v55, 0.0
    %v59 = vadd.f32 %v57, %v58
    %60 = vadd.xlane.f32.xlu0 %v59
    %v61 = vpop.xlane.xlu0 %60
    %v62 = vrot.slane %v61, 4
    %v63 = vadd.f32 %v61, %v62
    %v64 = vrot.slane %v63, 2
    %v65 = vadd.f32 %v63, %v64
    %v66 = vrot.slane %v65, 1
    %v67 = vadd.f32 %v65, %v66
    %s68 = vtos %v67
    %s69 = smul.f32 %s68, 0.015625
    %s70 = scalar_lea.smem [#allocation2], 1
    %71 = sst [smem:[%s70]] %s69
    %v72 = vld [vmem:[%s4] sm:$0xff]
    %v73 = vld [vmem:[%s4 + $0x8] sm:$0xff]
    %v74 = vld [vmem:[%s4 + $0x10] sm:$0xff]
    %v75 = vld [vmem:[%s4 + $0x18] sm:$0xff]
    %v76 = vld [vmem:[%s4 + $0x20] sm:$0xff]
    %v77 = vld [vmem:[%s4 + $0x28] sm:$0xff]
    %v78 = vld [vmem:[%s4 + $0x30] sm:$0xff]
    %v79 = vld [vmem:[%s4 + $0x38] sm:$0xff]
    %v80 = vld [vmem:[%s4 + $0x40] sm:$0xff]
    %v81 = vld [vmem:[%s4 + $0x48] sm:$0xff]
    %v82 = vld [vmem:[%s4 + $0x50] sm:$0xff]
    %v83 = vld [vmem:[%s4 + $0x58] sm:$0xff]
    %v84 = vld [vmem:[%s4 + $0x60] sm:$0xff]
    %v85 = vld [vmem:[%s4 + $0x68] sm:$0xff]
    %v86 = vld [vmem:[%s4 + $0x70] sm:$0xff]
    %v87 = vld [vmem:[%s4 + $0x78] sm:$0xff]
    %v88 = vld [vmem:[%s4 + $0x80] sm:$0xff]
    %v89 = vld [vmem:[%s4 + $0x88] sm:$0xff]
    %v90 = vld [vmem:[%s4 + $0x90] sm:$0xff]
    %v91 = vld [vmem:[%s4 + $0x98] sm:$0xff]
    %v92 = vld [vmem:[%s4 + $0xa0] sm:$0xff]
    %v93 = vld [vmem:[%s4 + $0xa8] sm:$0xff]
    %v94 = vld [vmem:[%s4 + $0xb0] sm:$0xff]
    %v95 = vld [vmem:[%s4 + $0xb8] sm:$0xff]
    %v96 = vld [vmem:[%s4 + $0xc0] sm:$0xff]
    %v97 = vld [vmem:[%s4 + $0xc8] sm:$0xff]
    %v98 = vld [vmem:[%s4 + $0xd0] sm:$0xff]
    %v99 = vld [vmem:[%s4 + $0xd8] sm:$0xff]
    %v100 = vld [vmem:[%s4 + $0xe0] sm:$0xff]
    %v101 = vld [vmem:[%s4 + $0xe8] sm:$0xff]
    %v102 = vld [vmem:[%s4 + $0xf0] sm:$0xff]
    %v103 = vld [vmem:[%s4 + $0xf8] sm:$0xff]
    %v104 = vld [vmem:[%s4 + $0x100] sm:$0xff]
    %v105 = vld [vmem:[%s4 + $0x108] sm:$0xff]
    %v106 = vld [vmem:[%s4 + $0x110] sm:$0xff]
    %v107 = vld [vmem:[%s4 + $0x118] sm:$0xff]
    %v108 = vld [vmem:[%s4 + $0x120] sm:$0xff]
    %v109 = vld [vmem:[%s4 + $0x128] sm:$0xff]
    %v110 = vld [vmem:[%s4 + $0x130] sm:$0xff]
    %v111 = vld [vmem:[%s4 + $0x138] sm:$0xff]
    %v112 = vld [vmem:[%s4 + $0x140] sm:$0xff]
    %v113 = vld [vmem:[%s4 + $0x148] sm:$0xff]
    %v114 = vld [vmem:[%s4 + $0x150] sm:$0xff]
    %v115 = vld [vmem:[%s4 + $0x158] sm:$0xff]
    %v116 = vld [vmem:[%s4 + $0x160] sm:$0xff]
    %v117 = vld [vmem:[%s4 + $0x168] sm:$0xff]
    %v118 = vld [vmem:[%s4 + $0x170] sm:$0xff]
    %v119 = vld [vmem:[%s4 + $0x178] sm:$0xff]
    %v120 = vld [vmem:[%s5] sm:$0xff]
    %v121 = vld [vmem:[%s5 + $0x8] sm:$0xff]
    %v122 = vld [vmem:[%s5 + $0x10] sm:$0xff]
    %v123 = vld [vmem:[%s5 + $0x18] sm:$0xff]
    %v124 = vld [vmem:[%s5 + $0x20] sm:$0xff]
    %v125 = vld [vmem:[%s5 + $0x28] sm:$0xff]
    %v126 = vld [vmem:[%s5 + $0x30] sm:$0xff]
    %v127 = vld [vmem:[%s5 + $0x38] sm:$0xff]
    %v128 = vld [vmem:[%s5 + $0x40] sm:$0xff]
    %v129 = vld [vmem:[%s5 + $0x48] sm:$0xff]
    %v130 = vld [vmem:[%s5 + $0x50] sm:$0xff]
    %v131 = vld [vmem:[%s5 + $0x58] sm:$0xff]
    %v132 = vld [vmem:[%s5 + $0x60] sm:$0xff]
    %v133 = vld [vmem:[%s5 + $0x68] sm:$0xff]
    %v134 = vld [vmem:[%s5 + $0x70] sm:$0xff]
    %v135 = vld [vmem:[%s5 + $0x78] sm:$0xff]
    %v136 = vld [vmem:[%s5 + $0x80] sm:$0xff]
    %v137 = vld [vmem:[%s5 + $0x88] sm:$0xff]
    %v138 = vld [vmem:[%s5 + $0x90] sm:$0xff]
    %v139 = vld [vmem:[%s5 + $0x98] sm:$0xff]
    %v140 = vld [vmem:[%s5 + $0xa0] sm:$0xff]
    %v141 = vld [vmem:[%s5 + $0xa8] sm:$0xff]
    %v142 = vld [vmem:[%s5 + $0xb0] sm:$0xff]
    %v143 = vld [vmem:[%s5 + $0xb8] sm:$0xff]
    %v144 = vld [vmem:[%s5 + $0xc0] sm:$0xff]
    %v145 = vld [vmem:[%s5 + $0xc8] sm:$0xff]
    %v146 = vld [vmem:[%s5 + $0xd0] sm:$0xff]
    %v147 = vld [vmem:[%s5 + $0xd8] sm:$0xff]
    %v148 = vld [vmem:[%s5 + $0xe0] sm:$0xff]
    %v149 = vld [vmem:[%s5 + $0xe8] sm:$0xff]
    %v150 = vld [vmem:[%s5 + $0xf0] sm:$0xff]
    %v151 = vld [vmem:[%s5 + $0xf8] sm:$0xff]
    %v152 = vld [vmem:[%s5 + $0x100] sm:$0xff]
    %v153 = vld [vmem:[%s5 + $0x108] sm:$0xff]
    %v154 = vld [vmem:[%s5 + $0x110] sm:$0xff]
    %v155 = vld [vmem:[%s5 + $0x118] sm:$0xff]
    %v156 = vld [vmem:[%s5 + $0x120] sm:$0xff]
    %v157 = vld [vmem:[%s5 + $0x128] sm:$0xff]
    %v158 = vld [vmem:[%s5 + $0x130] sm:$0xff]
    %v159 = vld [vmem:[%s5 + $0x138] sm:$0xff]
    %v160 = vld [vmem:[%s5 + $0x140] sm:$0xff]
    %v161 = vld [vmem:[%s5 + $0x148] sm:$0xff]
    %v162 = vld [vmem:[%s5 + $0x150] sm:$0xff]
    %v163 = vld [vmem:[%s5 + $0x158] sm:$0xff]
    %v164 = vld [vmem:[%s5 + $0x160] sm:$0xff]
    %v165 = vld [vmem:[%s5 + $0x168] sm:$0xff]
    %v166 = vld [vmem:[%s5 + $0x170] sm:$0xff]
    %v167 = vld [vmem:[%s5 + $0x178] sm:$0xff]
    %v168 = vsub.f32 %v72, %v120
    %v169 = vsub.f32 %v73, %v121
    %v170 = vsub.f32 %v74, %v122
    %v171 = vsub.f32 %v75, %v123
    %v172 = vsub.f32 %v76, %v124
    %v173 = vsub.f32 %v77, %v125
    %v174 = vsub.f32 %v78, %v126
    %v175 = vsub.f32 %v79, %v127
    %v176 = vsub.f32 %v80, %v128
    %v177 = vsub.f32 %v81, %v129
    %v178 = vsub.f32 %v82, %v130
    %v179 = vsub.f32 %v83, %v131
    %v180 = vsub.f32 %v84, %v132
    %v181 = vsub.f32 %v85, %v133
    %v182 = vsub.f32 %v86, %v134
    %v183 = vsub.f32 %v87, %v135
    %v184 = vsub.f32 %v88, %v136
    %v185 = vsub.f32 %v89, %v137
    %v186 = vsub.f32 %v90, %v138
    %v187 = vsub.f32 %v91, %v139
    %v188 = vsub.f32 %v92, %v140
    %v189 = vsub.f32 %v93, %v141
    %v190 = vsub.f32 %v94, %v142
    %v191 = vsub.f32 %v95, %v143
    %v192 = vsub.f32 %v96, %v144
    %v193 = vsub.f32 %v97, %v145
    %v194 = vsub.f32 %v98, %v146
    %v195 = vsub.f32 %v99, %v147
    %v196 = vsub.f32 %v100, %v148
    %v197 = vsub.f32 %v101, %v149
    %v198 = vsub.f32 %v102, %v150
    %v199 = vsub.f32 %v103, %v151
    %v200 = vsub.f32 %v104, %v152
    %v201 = vsub.f32 %v105, %v153
    %v202 = vsub.f32 %v106, %v154
    %v203 = vsub.f32 %v107, %v155
    %v204 = vsub.f32 %v108, %v156
    %v205 = vsub.f32 %v109, %v157
    %v206 = vsub.f32 %v110, %v158
    %v207 = vsub.f32 %v111, %v159
    %v208 = vsub.f32 %v112, %v160
    %v209 = vsub.f32 %v113, %v161
    %v210 = vsub.f32 %v114, %v162
    %v211 = vsub.f32 %v115, %v163
    %v212 = vsub.f32 %v116, %v164
    %v213 = vsub.f32 %v117, %v165
    %v214 = vsub.f32 %v118, %v166
    %v215 = vsub.f32 %v119, %v167
    %v216 = vmul.f32 %v168, %v168
    %v217 = vmul.f32 %v169, %v169
    %v218 = vmul.f32 %v170, %v170
    %v219 = vmul.f32 %v171, %v171
    %v220 = vmul.f32 %v172, %v172
    %v221 = vmul.f32 %v173, %v173
    %v222 = vmul.f32 %v174, %v174
    %v223 = vmul.f32 %v175, %v175
    %v224 = vmul.f32 %v176, %v176
    %v225 = vmul.f32 %v177, %v177
    %v226 = vmul.f32 %v178, %v178
    %v227 = vmul.f32 %v179, %v179
    %v228 = vmul.f32 %v180, %v180
    %v229 = vmul.f32 %v181, %v181
    %v230 = vmul.f32 %v182, %v182
    %v231 = vmul.f32 %v183, %v183
    %v232 = vmul.f32 %v184, %v184
    %v233 = vmul.f32 %v185, %v185
    %v234 = vmul.f32 %v186, %v186
    %v235 = vmul.f32 %v187, %v187
    %v236 = vmul.f32 %v188, %v188
    %v237 = vmul.f32 %v189, %v189
    %v238 = vmul.f32 %v190, %v190
    %v239 = vmul.f32 %v191, %v191
    %v240 = vmul.f32 %v192, %v192
    %v241 = vmul.f32 %v193, %v193
    %v242 = vmul.f32 %v194, %v194
    %v243 = vmul.f32 %v195, %v195
    %v244 = vmul.f32 %v196, %v196
    %v245 = vmul.f32 %v197, %v197
    %v246 = vmul.f32 %v198, %v198
    %v247 = vmul.f32 %v199, %v199
    %v248 = vmul.f32 %v200, %v200
    %v249 = vmul.f32 %v201, %v201
    %v250 = vmul.f32 %v202, %v202
    %v251 = vmul.f32 %v203, %v203
    %v252 = vmul.f32 %v204, %v204
    %v253 = vmul.f32 %v205, %v205
    %v254 = vmul.f32 %v206, %v206
    %v255 = vmul.f32 %v207, %v207
    %v256 = vmul.f32 %v208, %v208
    %v257 = vmul.f32 %v209, %v209
    %v258 = vmul.f32 %v210, %v210
    %v259 = vmul.f32 %v211, %v211
    %v260 = vmul.f32 %v212, %v212
    %v261 = vmul.f32 %v213, %v213
    %v262 = vmul.f32 %v214, %v214
    %v263 = vmul.f32 %v215, %v215
    %vm264 = vcmask 23552
    %v265 = vsel %vm264, %v216, 0.0
    %v266 = vsel %vm264, %v217, 0.0
    %v267 = vadd.f32 %v265, %v266
    %v268 = vsel %vm264, %v218, 0.0
    %v269 = vadd.f32 %v267, %v268
    %v270 = vsel %vm264, %v219, 0.0
    %v271 = vadd.f32 %v269, %v270
    %v272 = vsel %vm264, %v220, 0.0
    %v273 = vadd.f32 %v271, %v272
    %v274 = vsel %vm264, %v221, 0.0
    %v275 = vadd.f32 %v273, %v274
    %v276 = vsel %vm264, %v222, 0.0
    %v277 = vadd.f32 %v275, %v276
    %v278 = vsel %vm264, %v223, 0.0
    %v279 = vadd.f32 %v277, %v278
    %v280 = vsel %vm264, %v224, 0.0
    %v281 = vadd.f32 %v279, %v280
    %v282 = vsel %vm264, %v225, 0.0
    %v283 = vadd.f32 %v281, %v282
    %v284 = vsel %vm264, %v226, 0.0
    %v285 = vadd.f32 %v283, %v284
    %v286 = vsel %vm264, %v227, 0.0
    %v287 = vadd.f32 %v285, %v286
    %v288 = vsel %vm264, %v228, 0.0
    %v289 = vadd.f32 %v287, %v288
    %v290 = vsel %vm264, %v229, 0.0
    %v291 = vadd.f32 %v289, %v290
    %v292 = vsel %vm264, %v230, 0.0
    %v293 = vadd.f32 %v291, %v292
    %v294 = vsel %vm264, %v231, 0.0
    %v295 = vadd.f32 %v293, %v294
    %v296 = vsel %vm264, %v232, 0.0
    %v297 = vadd.f32 %v295, %v296
    %v298 = vsel %vm264, %v233, 0.0
    %v299 = vadd.f32 %v297, %v298
    %v300 = vsel %vm264, %v234, 0.0
    %v301 = vadd.f32 %v299, %v300
    %v302 = vsel %vm264, %v235, 0.0
    %v303 = vadd.f32 %v301, %v302
    %v304 = vsel %vm264, %v236, 0.0
    %v305 = vadd.f32 %v303, %v304
    %v306 = vsel %vm264, %v237, 0.0
    %v307 = vadd.f32 %v305, %v306
    %v308 = vsel %vm264, %v238, 0.0
    %v309 = vadd.f32 %v307, %v308
    %v310 = vsel %vm264, %v239, 0.0
    %v311 = vadd.f32 %v309, %v310
    %v312 = vsel %vm264, %v240, 0.0
    %v313 = vadd.f32 %v311, %v312
    %v314 = vsel %vm264, %v241, 0.0
    %v315 = vadd.f32 %v313, %v314
    %v316 = vsel %vm264, %v242, 0.0
    %v317 = vadd.f32 %v315, %v316
    %v318 = vsel %vm264, %v243, 0.0
    %v319 = vadd.f32 %v317, %v318
    %v320 = vsel %vm264, %v244, 0.0
    %v321 = vadd.f32 %v319, %v320
    %v322 = vsel %vm264, %v245, 0.0
    %v323 = vadd.f32 %v321, %v322
    %v324 = vsel %vm264, %v246, 0.0
    %v325 = vadd.f32 %v323, %v324
    %v326 = vsel %vm264, %v247, 0.0
    %v327 = vadd.f32 %v325, %v326
    %v328 = vsel %vm264, %v248, 0.0
    %v329 = vadd.f32 %v327, %v328
    %v330 = vsel %vm264, %v249, 0.0
    %v331 = vadd.f32 %v329, %v330
    %v332 = vsel %vm264, %v250, 0.0
    %v333 = vadd.f32 %v331, %v332
    %v334 = vsel %vm264, %v251, 0.0
    %v335 = vadd.f32 %v333, %v334
    %v336 = vsel %vm264, %v252, 0.0
    %v337 = vadd.f32 %v335, %v336
    %v338 = vsel %vm264, %v253, 0.0
    %v339 = vadd.f32 %v337, %v338
    %v340 = vsel %vm264, %v254, 0.0
    %v341 = vadd.f32 %v339, %v340
    %v342 = vsel %vm264, %v255, 0.0
    %v343 = vadd.f32 %v341, %v342
    %v344 = vsel %vm264, %v256, 0.0
    %v345 = vadd.f32 %v343, %v344
    %v346 = vsel %vm264, %v257, 0.0
    %v347 = vadd.f32 %v345, %v346
    %v348 = vsel %vm264, %v258, 0.0
    %v349 = vadd.f32 %v347, %v348
    %v350 = vsel %vm264, %v259, 0.0
    %v351 = vadd.f32 %v349, %v350
    %v352 = vsel %vm264, %v260, 0.0
    %v353 = vadd.f32 %v351, %v352
    %v354 = vsel %vm264, %v261, 0.0
    %v355 = vadd.f32 %v353, %v354
    %v356 = vsel %vm264, %v262, 0.0
    %v357 = vadd.f32 %v355, %v356
    %v358 = vsel %vm264, %v263, 0.0
    %v359 = vadd.f32 %v357, %v358
    %360 = vadd.xlane.f32.xlu0 %v359
    %v361 = vpop.xlane.xlu0 %360
    %v362 = vrot.slane %v361, 4
    %v363 = vadd.f32 %v361, %v362
    %v364 = vrot.slane %v363, 2
    %v365 = vadd.f32 %v363, %v364
    %v366 = vrot.slane %v365, 1
    %v367 = vadd.f32 %v365, %v366
    %s368 = vtos %v367
    %s369 = smul.f32 %s368, 0.00086805556
    %s370 = scalar_lea.smem [#allocation2], 2
    %371 = sst [smem:[%s370]] %s369
    // Predicated region
    $region26: #{tpu_custom_call.1} parent=1 // pred_check
      _
    $region27: #{tpu_custom_call.1} parent=1 // pred_check_branch
      %373 = sbr.rel (0) target = $region29
    $region28: #{tpu_custom_call.1} parent=1 // pred_region
      %s375 = ssub.s32 16, 16
      %376 = vsyncadd [#allocation3], %s375
      %379 = dma.smem_to_hbm [#allocation2], 16, %s6, [#allocation3]
    $region29: #{tpu_custom_call.1} parent=1 // pred_fallthru
      _
    // Predicated region
    $region30: #{tpu_custom_call.1} parent=1 // pred_check
      _
    $region31: #{tpu_custom_call.1} parent=1 // pred_check_branch
      %381 = sbr.rel (0) target = $region33
    $region32: #{tpu_custom_call.1} parent=1 // pred_region
      %382 = dma.done [#allocation3], 16
    $region33: #{tpu_custom_call.1} parent=1 // pred_fallthru
      _
    %383 = sfence
    %384 = vsyncpa [#allocation3], 1

</llo_original>
